<compile_context>
chip_gen: v7x
topology: tpu7x:2x2x1
jax: 0.10.0
libtpu: 0.0.40
codegen_flags: <defaults>
</compile_context>

<pallas_src>
import jax
import jax.numpy as jnp
from jax.experimental import pallas as pl
from jax.experimental.pallas import tpu as pltpu

_LANE = 128
_MAX_TILE_HW = 16384        # lanes per spatial tile (upper cap)
_TARGET_GRID_STEPS = 4      # keep both v7x TensorCores + the DMA pipeline busy
_UNROLL_MAX_C = 64          # above this, the channel reduction moves to the MXU


def _tpu_vmem_capacity_bytes():
    try:
        return int(pltpu.get_tpu_info().vmem_capacity_bytes)
    except Exception:
        return 64 << 20     # conservative default (v7x per-TensorCore VMEM)


def _plan_tiling(n, c, hw, dtype_bytes, use_mxu, tile_hw=None):
    """Pick a lane-dense spatial tile width and a matching scoped-VMEM limit."""
    cap = _tpu_vmem_capacity_bytes()
    sub = max(8, 32 // dtype_bytes)                 # sublane tiling: 8 f32 / 16 bf16 / 32 i8
    c_pad = -(-c // sub) * sub                      # real VMEM rows occupied per block
    if tile_hw is None:
        if hw <= _LANE:
            tile_hw = hw                            # single full-width block (equals full dim)
        else:
            # Block-buffer budget: ~24 MiB on 128-MiB parts (v5e/v6e), ~10 MiB on v7x (64 MiB).
            budget = (24 << 20) if cap > (96 << 20) else (10 << 20)
            per_lane = 4 * c_pad * dtype_bytes      # 2x double-buffered input + output blocks
            t = max(_LANE, budget // per_lane // _LANE * _LANE)
            if use_mxu:
                # Keep the per-tile MXU operand modest (it is consumed as one value).
                t = min(t, max(_LANE, (2 << 20) // (c_pad * dtype_bytes) // _LANE * _LANE))
            hw_floor = hw // _LANE * _LANE          # block must not exceed the array dim
            t = min(t, hw_floor, _MAX_TILE_HW)
            # Keep >= ~4 total grid steps (both v7x TensorCores fed) but never
            # shrink below 512 lanes (HBM-roofline knee).
            want_tiles = -(-_TARGET_GRID_STEPS // max(n, 1))
            split = max(512, hw // want_tiles // _LANE * _LANE)
            tile_hw = max(_LANE, min(t, split))
    block_bytes = 4 * c_pad * tile_hw * dtype_bytes
    vmem_limit = int(min(cap * 3 // 4, max(32 << 20, block_bytes * 3 // 2 + (4 << 20))))
    return tile_hw, vmem_limit


def _make_kernel(C, tile_hw, x_dtype, use_mxu):
    x_dtype = jnp.dtype(x_dtype)
    itemsize = x_dtype.itemsize
    is_bf16 = x_dtype == jnp.bfloat16
    is_f32 = x_dtype == jnp.float32
    native_gate = is_bf16 or is_f32                 # gate in the input's native dtype

    # Bound live vregs: partial f32 accumulators + one streamed row at a time.
    n_par = max(1, min(4, C, (64 * 1024) // (tile_hw * 4)))
    gate_chunk = max(1, min(8, (64 * 1024) // max(1, tile_hw * itemsize)))

    def kernel(w_ref, b_ref, x_ref, o_ref):
        # x_ref / o_ref: (1, C, TILE_HW) block in the caller's dtype (VMEM).
        # b_ref: (1,) f32 in SMEM.
        if use_mxu:
            # w_ref: (1, C) in VMEM (x dtype for bf16, f32 otherwise).
            # Channel reduction on the (otherwise idle) MXU, f32 accumulation.
            acc = jnp.dot(
                w_ref[...], x_ref[0],
                preferred_element_type=jnp.float32,
                precision=(jax.lax.Precision.HIGHEST if is_f32
                           else jax.lax.Precision.DEFAULT),
            )                                                   # (1, TILE_HW) f32
        else:
            # w_ref: (C,) f32 in SMEM. Streamed scalar x vector MAC with a few
            # partial accumulators so the f32 add chain does not serialize.
            accs = [x_ref[0, c:c + 1, :].astype(jnp.float32) * w_ref[c]
                    for c in range(n_par)]
            for c in range(n_par, C):
                j = c % n_par
                accs[j] = accs[j] + x_ref[0, c:c + 1, :].astype(jnp.float32) * w_ref[c]
            acc = accs[0]
            for a in accs[1:]:
                acc = acc + a                                   # (1, TILE_HW) f32

        mask_f32 = jax.nn.sigmoid(acc + b_ref[0])               # EUP sigmoid, f32
        mask = mask_f32.astype(x_dtype) if native_gate else mask_f32

        # Gate + store streamed in small static channel chunks (no full-block
        # f32 temporary); bf16 inputs are multiplied natively in bf16.
        for c0 in range(0, C, gate_chunk):
            c1 = min(C, c0 + gate_chunk)
            xr = x_ref[0, c0:c1, :]
            if native_gate:
                o_ref[0, c0:c1, :] = xr * mask
            else:
                o_ref[0, c0:c1, :] = (xr.astype(jnp.float32) * mask_f32).astype(o_ref.dtype)

    return kernel


def spatial_attention(x_nchw, weight, bias, *, tile_hw=None):
    """x_nchw: (N, C, H, W); weight: Conv2d(C,1,1).weight (any shape reshapable to (C,));
    bias: scalar / (1,)."""
    N, C, H, W = x_nchw.shape
    HW = H * W
    dtype = x_nchw.dtype
    dtype_bytes = jnp.dtype(dtype).itemsize

    use_mxu = C > _UNROLL_MAX_C
    tile_hw, vmem_limit = _plan_tiling(N, C, HW, dtype_bytes, use_mxu, tile_hw)
    n_tiles = pl.cdiv(HW, tile_hw)          # ragged last block handled by Pallas (no pad/slice)

    x = x_nchw.reshape(N, C, HW)            # metadata-only reshape
    b = jnp.asarray(bias, jnp.float32).reshape(1)

    if use_mxu:
        w_dtype = dtype if jnp.dtype(dtype) == jnp.bfloat16 else jnp.float32
        w = weight.reshape(1, C).astype(w_dtype)
        w_spec = pl.BlockSpec((1, C), lambda n, t: (0, 0))      # resident VMEM weight row
    else:
        w = weight.reshape(C).astype(jnp.float32)
        w_spec = pl.BlockSpec(memory_space=pltpu.MemorySpace.SMEM)

    out = pl.pallas_call(
        _make_kernel(C, tile_hw, dtype, use_mxu),
        out_shape=jax.ShapeDtypeStruct((N, C, HW), dtype),
        grid_spec=pltpu.PrefetchScalarGridSpec(
            num_scalar_prefetch=0,
            grid=(N, n_tiles),
            in_specs=[
                w_spec,                                              # conv weight
                pl.BlockSpec(memory_space=pltpu.MemorySpace.SMEM),   # conv bias (1,)
                pl.BlockSpec((1, C, tile_hw), lambda n, t: (n, 0, t)),
            ],
            out_specs=pl.BlockSpec((1, C, tile_hw), lambda n, t: (n, 0, t)),
        ),
        compiler_params=pltpu.CompilerParams(
            dimension_semantics=("parallel", "parallel"),
            vmem_limit_bytes=vmem_limit,
        ),
    )(w, b, x)

    return out.reshape(N, C, H, W)


def spatial_attention_ref(x_nchw, weight, bias):
    # Pure-JAX reference of the PyTorch forward (NCHW, 1x1 conv, sigmoid, gate).
    # Uses an explicit f32 elementwise reduction (no dot) so the reference is exact.
    xf = x_nchw.astype(jnp.float32)
    w = weight.reshape(-1).astype(jnp.float32)
    mask = jax.nn.sigmoid(
        (xf * w[None, :, None, None]).sum(axis=1, keepdims=True) + jnp.float32(bias))
    return (xf * mask).astype(x_nchw.dtype)


if __name__ == "__main__":
    # --- Primary check: small shapes from the module spec, f32, streaming path. ---
    key = jax.random.PRNGKey(0)
    kx, kw, kb = jax.random.split(key, 3)
    N, C, H, W = 2, 4, 16, 16
    x = jax.random.normal(kx, (N, C, H, W), dtype=jnp.float32)
    weight = jax.random.normal(kw, (C,), dtype=jnp.float32) * 0.1   # Conv2d(C,1,1) weight
    bias = jax.random.normal(kb, (), dtype=jnp.float32) * 0.1

    out = jax.block_until_ready(spatial_attention(x, weight, bias))
    ref = spatial_attention_ref(x, weight, bias)
    assert out.shape == x.shape and out.dtype == x.dtype
    assert jnp.allclose(out, ref, atol=1e-5, rtol=1e-5)

    # --- Ragged spatial size (HW=130) + bf16 native gate; no pad/slice in wrapper. ---
    k1, k2, k3 = jax.random.split(jax.random.PRNGKey(1), 3)
    x2 = jax.random.normal(k1, (1, 4, 10, 13), dtype=jnp.bfloat16)
    w2 = jax.random.normal(k2, (4,), dtype=jnp.float32) * 0.1
    b2 = jax.random.normal(k3, (), dtype=jnp.float32) * 0.1
    out2 = jax.block_until_ready(spatial_attention(x2, w2, b2))
    ref2 = spatial_attention_ref(x2, w2, b2)
    assert out2.shape == x2.shape and out2.dtype == jnp.bfloat16
    assert jnp.allclose(out2.astype(jnp.float32), ref2.astype(jnp.float32),
                        atol=3e-2, rtol=3e-2)

    # --- Large channel count (C=128): channel reduction on the MXU, bf16 inputs. ---
    k4, k5, k6 = jax.random.split(jax.random.PRNGKey(2), 3)
    x3 = jax.random.normal(k4, (1, 128, 16, 16), dtype=jnp.bfloat16)
    w3 = jax.random.normal(k5, (128,), dtype=jnp.float32) * 0.05
    b3 = jax.random.normal(k6, (), dtype=jnp.float32) * 0.1
    out3 = jax.block_until_ready(spatial_attention(x3, w3, b3))
    ref3 = spatial_attention_ref(x3, w3, b3)
    assert out3.shape == x3.shape and out3.dtype == jnp.bfloat16
    assert jnp.allclose(out3.astype(jnp.float32), ref3.astype(jnp.float32),
                        atol=5e-2, rtol=5e-2)

    print("KERNEL_OK")
</pallas_src>

<mosaic_0001>
module attributes {stable_mosaic.version = 11 : i64} {
  func.func @kernel(%arg0: i32, %arg1: i32, %arg2: memref<4xf32, #tpu.memory_space<smem>>, %arg3: memref<1xf32, #tpu.memory_space<smem>>, %arg4: memref<1x4x256xf32, #tpu.memory_space<vmem>>, %arg5: memref<1x4x256xf32, #tpu.memory_space<vmem>>) attributes {dimension_semantics = [#tpu.dimension_semantics<parallel>, #tpu.dimension_semantics<parallel>], iteration_bounds = array<i64: 2, 1>, scalar_prefetch = 0 : i64, scratch_operands = 0 : i64, tpu.core_type = #tpu.core_type<tc>, window_params = [{transform_indices = @transform_0, window_bounds = array<i64: 4>}, {transform_indices = @transform_1, window_bounds = array<i64: 1>}, {transform_indices = @transform_2, window_bounds = array<i64: 1, 4, 256>}, {transform_indices = @transform_3, window_bounds = array<i64: 1, 4, 256>}]} {
    %c0 = arith.constant 0 : index
    %c0_0 = arith.constant 0 : index
    %c0_1 = arith.constant 0 : index
    %0 = vector.load %arg4[%c0, %c0_0, %c0_1] : memref<1x4x256xf32, #tpu.memory_space<vmem>>, vector<1x1x256xf32>
    %1 = vector.shape_cast %0 : vector<1x1x256xf32> to vector<1x256xf32>
    %c0_2 = arith.constant 0 : index
    %2 = memref.load %arg2[%c0_2] : memref<4xf32, #tpu.memory_space<smem>>
    %3 = vector.broadcast %2 : f32 to vector<1x256xf32>
    %4 = arith.mulf %1, %3 : vector<1x256xf32>
    %c0_3 = arith.constant 0 : index
    %c1 = arith.constant 1 : index
    %c0_4 = arith.constant 0 : index
    %5 = vector.load %arg4[%c0_3, %c1, %c0_4] : memref<1x4x256xf32, #tpu.memory_space<vmem>>, vector<1x1x256xf32>
    %6 = vector.shape_cast %5 : vector<1x1x256xf32> to vector<1x256xf32>
    %c1_5 = arith.constant 1 : index
    %7 = memref.load %arg2[%c1_5] : memref<4xf32, #tpu.memory_space<smem>>
    %8 = vector.broadcast %7 : f32 to vector<1x256xf32>
    %9 = arith.mulf %6, %8 : vector<1x256xf32>
    %c0_6 = arith.constant 0 : index
    %c2 = arith.constant 2 : index
    %c0_7 = arith.constant 0 : index
    %10 = vector.load %arg4[%c0_6, %c2, %c0_7] : memref<1x4x256xf32, #tpu.memory_space<vmem>>, vector<1x1x256xf32>
    %11 = vector.shape_cast %10 : vector<1x1x256xf32> to vector<1x256xf32>
    %c2_8 = arith.constant 2 : index
    %12 = memref.load %arg2[%c2_8] : memref<4xf32, #tpu.memory_space<smem>>
    %13 = vector.broadcast %12 : f32 to vector<1x256xf32>
    %14 = arith.mulf %11, %13 : vector<1x256xf32>
    %c0_9 = arith.constant 0 : index
    %c3 = arith.constant 3 : index
    %c0_10 = arith.constant 0 : index
    %15 = vector.load %arg4[%c0_9, %c3, %c0_10] : memref<1x4x256xf32, #tpu.memory_space<vmem>>, vector<1x1x256xf32>
    %16 = vector.shape_cast %15 : vector<1x1x256xf32> to vector<1x256xf32>
    %c3_11 = arith.constant 3 : index
    %17 = memref.load %arg2[%c3_11] : memref<4xf32, #tpu.memory_space<smem>>
    %18 = vector.broadcast %17 : f32 to vector<1x256xf32>
    %19 = arith.mulf %16, %18 : vector<1x256xf32>
    %20 = arith.addf %4, %9 : vector<1x256xf32>
    %21 = arith.addf %20, %14 : vector<1x256xf32>
    %22 = arith.addf %21, %19 : vector<1x256xf32>
    %c0_12 = arith.constant 0 : index
    %23 = memref.load %arg3[%c0_12] : memref<1xf32, #tpu.memory_space<smem>>
    %24 = vector.broadcast %23 : f32 to vector<1x256xf32>
    %25 = arith.addf %22, %24 : vector<1x256xf32>
    %26 = arith.negf %25 : vector<1x256xf32>
    %27 = math.exp %26 : vector<1x256xf32>
    %cst = arith.constant 1.000000e+00 : f32
    %28 = vector.broadcast %cst : f32 to vector<1x256xf32>
    %29 = arith.addf %28, %27 : vector<1x256xf32>
    %30 = arith.divf %28, %29 : vector<1x256xf32>
    %c0_13 = arith.constant 0 : index
    %c0_14 = arith.constant 0 : index
    %c0_15 = arith.constant 0 : index
    %31 = vector.load %arg4[%c0_13, %c0_14, %c0_15] : memref<1x4x256xf32, #tpu.memory_space<vmem>>, vector<1x4x256xf32>
    %32 = vector.shape_cast %31 : vector<1x4x256xf32> to vector<4x256xf32>
    %33 = vector.broadcast %30 : vector<1x256xf32> to vector<4x256xf32>
    %34 = arith.mulf %32, %33 : vector<4x256xf32>
    %c0_16 = arith.constant 0 : index
    %c0_17 = arith.constant 0 : index
    %c0_18 = arith.constant 0 : index
    %35 = vector.load %arg5[%c0_16, %c0_17, %c0_18] : memref<1x4x256xf32, #tpu.memory_space<vmem>>, vector<1x4x256xf32>
    %36 = vector.shape_cast %35 : vector<1x4x256xf32> to vector<4x256xf32>
    %37 = vector.shape_cast %34 : vector<4x256xf32> to vector<1x4x256xf32>
    tpu.vector_store %arg5[%c0_16, %c0_17, %c0_18], %37 {strides = array<i32>} : memref<1x4x256xf32, #tpu.memory_space<vmem>>, vector<1x4x256xf32>,
    return
  }
  func.func @transform_0(%arg0: i32, %arg1: i32) -> i32 {
    %c0_i32 = arith.constant 0 : i32
    %c0_i32_0 = arith.constant 0 : i32
    return %c0_i32 : i32
  }
  func.func @transform_1(%arg0: i32, %arg1: i32) -> i32 {
    %c0_i32 = arith.constant 0 : i32
    %c0_i32_0 = arith.constant 0 : i32
    return %c0_i32 : i32
  }
  func.func @transform_2(%arg0: i32, %arg1: i32) -> (i32, i32, i32) {
    %c0_i32 = arith.constant 0 : i32
    %c0_i32_0 = arith.constant 0 : i32
    return %arg0, %c0_i32, %arg1 : i32, i32, i32
  }
  func.func @transform_3(%arg0: i32, %arg1: i32) -> (i32, i32, i32) {
    %c0_i32 = arith.constant 0 : i32
    %c0_i32_0 = arith.constant 0 : i32
    return %arg0, %c0_i32, %arg1 : i32, i32, i32
  }
}

</mosaic_0001>

<llo_original>
// kernel: tpu_custom_call.1
$region0: #{tpu_custom_call.1}
  #allocation0 [shape = 'u32[]', space=smem, size = 0x4, offset = 0x4, fixed_abs, tag = 'smem constant byte address 0x4 - core index']
  #allocation1 [shape = 'u32[144,128]{1,0:T(1,128)}', space=vmem, size = 0x12000, scoped, tag = 'internal scratch']
  #allocation2 [shape = 'f32[1]{0:T(128)S(6)}', space=smem, size = 0x200, scoped, tag = 'scoped memory for tpu_custom_call.1']
  %s0 = inlined_call_operand.vmem [shape: f32[4], index: 0, kind: input, shape index: {}]
  %s1 = inlined_call_operand.<no memory space> [shape: f32[1], index: 1, kind: input, shape index: {}]
  %s2 = inlined_call_operand.hbm [shape: f32[2,4,256], index: 2, kind: input, shape index: {}]
  %s3 = inlined_call_operand.hbm [shape: f32[2,4,256], index: 3, kind: output, shape index: {}]
  %s4 = sld [smem:[#allocation0]]
  $region53: #{tpu_custom_call.1} parent=0
    _
  %s6 = ssub.s32 1, %s4
  %s7 = scalar_select 0, %s6, %s4
  %8 = sst [smem:[#allocation2]] %s1
  $region1: #{tpu_custom_call.1} parent=0
    #allocation3 [shape = 'u8[512]{0}', space=smem, size = 0x200, scoped, tag = 'input window, operand 0, single buffered']
    #allocation4 [shape = 's32[2]{0}', space=sflag, size = 0x8, scoped, tag = 'scoped memory for tpu_custom_call.1']
    #allocation5 [shape = 's32[2]{0}', space=sflag, size = 0x8, scoped, tag = 'scoped memory for tpu_custom_call.1']
    #allocation6 [shape = 's32[2]{0}', space=sflag, size = 0x8, scoped, tag = 'scoped memory for tpu_custom_call.1']
    #allocation7 [shape = 'u8[8192]{0}', space=vmem, size = 0x2000, scoped, tag = 'input window, operand 2']
    #allocation8 [shape = 'u8[8192]{0}', space=vmem, size = 0x2000, scoped, tag = 'output window, operand 0']
    %9 = vsyncpa [#allocation6], 0
    %10 = vsyncpa [#allocation4], 0
    %s11 = scalar_lea.sflag [#allocation4], 1
    %12 = vsyncpa %s11, 0
    %13 = vsyncpa [#allocation5], 0
    %s14 = scalar_lea.sflag [#allocation5], 1
    %15 = vsyncpa %s14, 0
    loop: start=0, step=1, limit=4
    $region2: #{tpu_custom_call.1} parent=1 // loop_pre_header
      _
    $region3: #{tpu_custom_call.1} parent=1 // loop_header
      %s17 = sphi 0, %s21
      %p18 = scmp.ge.s32.totalorder %s17, 4
      %s24 = sphi 0, %s36
      %s25 = sphi 0, %s32
      %s26 = sphi 0, %s24
      %s27 = sphi 0, %s25
      %s28 = sphi 0, %s26
      %s29 = sphi 0, %s27
      %s37 = sphi 0, %s37
      %s39 = sphi 0, %s37
      %s40 = sphi 0, %s39
      %s54 = sphi 0, %s40
      %s58 = sphi 0, %s58
      %s60 = sphi 0, %s58
      %s61 = sphi 0, %s60
      %s75 = sphi 0, %s61
      %s83 = sphi 0, %s85
      %s86 = sphi 0, %s83
      %s87 = sphi 0, %s86
      %s103 = sphi 0, %s87
      %s111 = sphi 0, %s113
      %s114 = sphi 0, %s111
      %s115 = sphi 0, %s114
      %s131 = sphi 0, %s115
    $region4: #{tpu_custom_call.1} parent=1 // loop_header_branch
      %20 = sbr.rel (%p18) target = $region8
    $region5: #{tpu_custom_call.1} parent=1 // loop_body
      %s22 = ssub.s32 %s17, 1
      %s23 = ssub.s32 %s17, 2
      %s30 = sadd.s32 1, %s25
      %p31 = scmp.ge.s32.totalorder %s30, 1
      %s32 = scalar_select %p31, 0, %s30
      %s33 = sadd.s32 1, %s24
      %s34 = scalar_select %p31, %s33, %s24
      %p35 = scmp.ge.s32.totalorder %s34, 2
      %s36 = scalar_select %p35, 0, %s34
      %s38 = sadd.s32 %s37, 1
      %p41 = scmp.eq.s32.totalorder %s17, 1
      %p42 = scmp.ne.s32.totalorder %s37, %s39
      %p43 = scmp.eq.s32.totalorder %s17, 0
      %p44 = por %p42, %p43
      %p45 = scmp.ne.s32.totalorder %s37, %s39
      %p46 = scmp.eq.s32.totalorder %s22, 1
      %p47 = por %p45, %p46
      %p48 = scmp.ne.s32.totalorder %s39, %s40
      %p49 = scmp.eq.s32.totalorder %s22, 0
      %p50 = por %p48, %p49
      %p51 = scmp.ne.s32.totalorder %s39, %s40
      %p52 = scmp.eq.s32.totalorder %s23, 1
      %p53 = por %p51, %p52
      %p55 = scmp.ne.s32.totalorder %s40, %s54
      %p56 = scmp.eq.s32.totalorder %s23, 0
      %p57 = por %p55, %p56
      %s59 = sadd.s32 %s58, 1
      %p62 = scmp.eq.s32.totalorder %s17, 1
      %p63 = scmp.ne.s32.totalorder %s58, %s60
      %p64 = scmp.eq.s32.totalorder %s17, 0
      %p65 = por %p63, %p64
      %p66 = scmp.ne.s32.totalorder %s58, %s60
      %p67 = scmp.eq.s32.totalorder %s22, 1
      %p68 = por %p66, %p67
      %p69 = scmp.ne.s32.totalorder %s60, %s61
      %p70 = scmp.eq.s32.totalorder %s22, 0
      %p71 = por %p69, %p70
      %p72 = scmp.ne.s32.totalorder %s60, %s61
      %p73 = scmp.eq.s32.totalorder %s23, 1
      %p74 = por %p72, %p73
      %p76 = scmp.ne.s32.totalorder %s61, %s75
      %p77 = scmp.eq.s32.totalorder %s23, 0
      %p78 = por %p76, %p77
      %s79 = ssub.s32 %s24, %s36
      %s80 = ssub.s32 %s25, %s32
      %s81 = sor.u32 %s79, %s80
      %p82 = scmp.eq.s32.totalorder %s81, 0
      %s84 = sadd.s32 %s83, 1
      %s85 = scalar_select %p82, %s83, %s84
      %p88 = pneg %p82
      %p89 = scmp.eq.s32.totalorder %s17, 1
      %p90 = por %p88, %p89
      %p91 = scmp.ne.s32.totalorder %s83, %s86
      %p92 = scmp.eq.s32.totalorder %s17, 0
      %p93 = por %p91, %p92
      %p94 = scmp.ne.s32.totalorder %s83, %s86
      %p95 = scmp.eq.s32.totalorder %s22, 1
      %p96 = por %p94, %p95
      %p97 = scmp.ne.s32.totalorder %s86, %s87
      %p98 = scmp.eq.s32.totalorder %s22, 0
      %p99 = por %p97, %p98
      %p100 = scmp.ne.s32.totalorder %s86, %s87
      %p101 = scmp.eq.s32.totalorder %s23, 1
      %p102 = por %p100, %p101
      %p104 = scmp.ne.s32.totalorder %s87, %s103
      %p105 = scmp.eq.s32.totalorder %s23, 0
      %p106 = por %p104, %p105
      %s107 = ssub.s32 %s24, %s36
      %s108 = ssub.s32 %s25, %s32
      %s109 = sor.u32 %s107, %s108
      %p110 = scmp.eq.s32.totalorder %s109, 0
      %s112 = sadd.s32 %s111, 1
      %s113 = scalar_select %p110, %s111, %s112
      %p116 = pneg %p110
      %p117 = scmp.eq.s32.totalorder %s17, 1
      %p118 = por %p116, %p117
      %p119 = scmp.ne.s32.totalorder %s111, %s114
      %p120 = scmp.eq.s32.totalorder %s17, 0
      %p121 = por %p119, %p120
      %p122 = scmp.ne.s32.totalorder %s111, %s114
      %p123 = scmp.eq.s32.totalorder %s22, 1
      %p124 = por %p122, %p123
      %p125 = scmp.ne.s32.totalorder %s114, %s115
      %p126 = scmp.eq.s32.totalorder %s22, 0
      %p127 = por %p125, %p126
      %p128 = scmp.ne.s32.totalorder %s114, %s115
      %p129 = scmp.eq.s32.totalorder %s23, 1
      %p130 = por %p128, %p129
      %p132 = scmp.ne.s32.totalorder %s115, %s131
      %p133 = scmp.eq.s32.totalorder %s23, 0
      %p134 = por %p132, %p133
      %p135 = scmp.le.s32.totalorder 1, %s17
      %p136 = scmp.lt.s32.totalorder %s17, 3
      %p137 = pnand %p135, %p136
      %p138 = pneg %p137
      // Predicated region
      $region9: #{tpu_custom_call.1} parent=5 // pred_check
        _
      $region10: #{tpu_custom_call.1} parent=5 // pred_check_branch
        %140 = sbr.rel (%p137) target = $region12
      $region11: #{tpu_custom_call.1} parent=5 // pred_region
        %s141 = ssub.s32 %s17, 1
        // Predicated region
        $region13: #{tpu_custom_call.1} parent=11 // pred_check
          %p142 = pneg %p50
        $region14: #{tpu_custom_call.1} parent=11 // pred_check_branch
          %144 = sbr.rel (%p142) target = $region16
        $region15: #{tpu_custom_call.1} parent=11 // pred_region
          %s146 = ssub.s32 16, 16
          %147 = vsyncadd [#allocation6], %s146
          %s149 = sshll.u32 %s0, 4
          %s150 = int_to_ptr.vmem [resolvable:$true] %s149
          %152 = dma.vmem_to_smem %s150, 16, [#allocation3], [#allocation6]
        $region16: #{tpu_custom_call.1} parent=11 // pred_fallthru
          _
        // Predicated region
        $region17: #{tpu_custom_call.1} parent=11 // pred_check
          %p153 = pneg %p71
        $region18: #{tpu_custom_call.1} parent=11 // pred_check_branch
          %155 = sbr.rel (%p153) target = $region20
        $region19: #{tpu_custom_call.1} parent=11 // pred_region
          _
        $region20: #{tpu_custom_call.1} parent=11 // pred_fallthru
          _
      $region12: #{tpu_custom_call.1} parent=5 // pred_fallthru
        _
      %p156 = scmp.lt.s32.totalorder %s17, 2
      // Predicated region
      $region21: #{tpu_custom_call.1} parent=5 // pred_check
        %p157 = pneg %p156
      $region22: #{tpu_custom_call.1} parent=5 // pred_check_branch
        %159 = sbr.rel (%p157) target = $region24
      $region23: #{tpu_custom_call.1} parent=5 // pred_region
        // Predicated region
        $region25: #{tpu_custom_call.1} parent=23 // pred_check
          %p160 = pneg %p93
        $region26: #{tpu_custom_call.1} parent=23 // pred_check_branch
          %162 = sbr.rel (%p160) target = $region28
        $region27: #{tpu_custom_call.1} parent=23 // pred_region
          %s163 = sand.u32 %s83, 1
          %s164 = scalar_lea.sflag [#allocation4], %s163
          %s165 = sand.u32 %s83, 1
          %s166 = smul.addr %s165, 8
          %s167 = scalar_lea.vmem [#allocation7], %s166
          %s168 = smul.u32 2, %s25
          %s170 = ssub.s32 128, 128
          %171 = vsyncadd %s164, %s170
          %s172 = smul.addr %s24, 2
          %s173 = sadd.s32 %s168, %s172
          %s174 = smul.addr %s173, 64
          %s175 = scalar_lea.hbm %s2, %s174
          %s177 = sshll.u32 %s167, 4
          %s178 = int_to_ptr.vmem [resolvable:$true] %s177
          %180 = dma.hbm_to_vmem [thread:$0]  %s175, 128, %s178, %s164
        $region28: #{tpu_custom_call.1} parent=23 // pred_fallthru
          _
      $region24: #{tpu_custom_call.1} parent=5 // pred_fallthru
        _
      %p181 = scmp.le.s32.totalorder 1, %s17
      %p182 = scmp.lt.s32.totalorder %s17, 3
      %p183 = pnand %p181, %p182
      %p184 = pneg %p183
      // Predicated region
      $region29: #{tpu_custom_call.1} parent=5 // pred_check
        _
      $region30: #{tpu_custom_call.1} parent=5 // pred_check_branch
        %186 = sbr.rel (%p183) target = $region32
      $region31: #{tpu_custom_call.1} parent=5 // pred_region
        %s187 = ssub.s32 %s17, 1
        // Predicated region
        $region33: #{tpu_custom_call.1} parent=31 // pred_check
          %p188 = pneg %p50
        $region34: #{tpu_custom_call.1} parent=31 // pred_check_branch
          %190 = sbr.rel (%p188) target = $region36
        $region35: #{tpu_custom_call.1} parent=31 // pred_region
          %191 = dma.done [#allocation6], 16
        $region36: #{tpu_custom_call.1} parent=31 // pred_fallthru
          _
        %s192 = sand.u32 %s86, 1
        %s193 = scalar_lea.sflag [#allocation4], %s192
        %s194 = sand.u32 %s86, 1
        %s195 = smul.addr %s194, 8
        %s196 = scalar_lea.vmem [#allocation7], %s195
        // Predicated region
        $region37: #{tpu_custom_call.1} parent=31 // pred_check
          %p197 = pneg %p99
        $region38: #{tpu_custom_call.1} parent=31 // pred_check_branch
          %199 = sbr.rel (%p197) target = $region40
        $region39: #{tpu_custom_call.1} parent=31 // pred_region
          %200 = dma.done %s193, 128
        $region40: #{tpu_custom_call.1} parent=31 // pred_fallthru
          _
        %201 = sfence
        %p202 = pneg %p50
        %p203 = pneg %p47
        %p204 = pneg %p71
        %p205 = pneg %p68
        %s206 = sand.u32 %s86, 1
        %s207 = scalar_lea.sflag [#allocation4], %s206
        %s208 = sand.u32 %s86, 1
        %s209 = smul.addr %s208, 8
        %s210 = scalar_lea.vmem [#allocation7], %s209
        %p211 = pneg %p99
        %p212 = pneg %p96
        %p213 = pneg %p127
        %p214 = pneg %p124
        %s215 = sand.u32 %s114, 1
        %s216 = scalar_lea.sflag [#allocation5], %s215
        %s217 = sand.u32 %s114, 1
        %s218 = smul.addr %s217, 8
        %s219 = scalar_lea.vmem [#allocation8], %s218
        %s220 = smul.u32 2, %s27
        %s221 = smul.u32 2, %s27
        %v222 = vld [vmem:[%s196] ss:$4 sm:$0x3]
        %s223 = sld [smem:[#allocation3]]
        %v224 = vstv %s223
        %v225 = vmul.f32 %v222, %v224
        %s226 = scalar_lea.vmem %s196, 1 [#allocation7]
        %v227 = vld [vmem:[%s226] ss:$4 sm:$0x3]
        %s228 = sld [smem:[#allocation3 + $0x1]]
        %v229 = vstv %s228
        %v230 = vmul.f32 %v227, %v229
        %s231 = scalar_lea.vmem %s196, 2 [#allocation7]
        %v232 = vld [vmem:[%s231] ss:$4 sm:$0x3]
        %s233 = sld [smem:[#allocation3 + $0x2]]
        %v234 = vstv %s233
        %v235 = vmul.f32 %v232, %v234
        %s236 = scalar_lea.vmem %s196, 3 [#allocation7]
        %v237 = vld [vmem:[%s236] ss:$4 sm:$0x3]
        %s238 = sld [smem:[#allocation3 + $0x3]]
        %v239 = vstv %s238
        %v240 = vmul.f32 %v237, %v239
        %v241 = vadd.f32 %v225, %v230
        %v242 = vadd.f32 %v241, %v235
        %v243 = vadd.f32 %v242, %v240
        %s244 = sld [smem:[#allocation2]]
        %v245 = vstv %s244
        %v246 = vadd.f32 %v243, %v245
        %v247 = vxor.u32 %v246, 2147483648
        %v248 = vmul.f32 %v247, 1.442695
        %v249 = vpow.pop %v248
        %v250 = vadd.f32 %v249, 1.0
        %v251 = vrcp.pop %v250
        %v252 = vmul.f32 1.0, %v251
        %v253 = vld [vmem:[%s196] sm:$0xff]
        %v255 = vlaneseq
        %v256 = vshrl.u32 %v255, 7
        %v257 = vsub.s32 0, %v256
        %v258 = vrot.slane %v252, %v257
        %v259 = vlaneseq
        %v260 = vshrl.u32 %v259, 7
        %v261 = vsub.s32 1, %v260
        %v262 = vrot.slane %v252, %v261
        %v263 = vcombine.low %v258, %v262
        %v265 = vmul.f32 %v253, %v263
        %266 = vst [vmem:[%s219] sm:$0xff] %v265
        %s267 = sand.u32 %s114, 1
        %s268 = scalar_lea.sflag [#allocation5], %s267
        %s269 = sand.u32 %s114, 1
        %s270 = smul.addr %s269, 8
        %s271 = scalar_lea.vmem [#allocation8], %s270
        // Predicated region
        $region41: #{tpu_custom_call.1} parent=31 // pred_check
          %p272 = pneg %p124
        $region42: #{tpu_custom_call.1} parent=31 // pred_check_branch
          %274 = sbr.rel (%p272) target = $region44
        $region43: #{tpu_custom_call.1} parent=31 // pred_region
          %s275 = smul.u32 2, %s27
          %s277 = ssub.s32 128, 128
          %278 = vsyncadd %s268, %s277
          %s279 = smul.addr %s26, 2
          %s280 = sadd.s32 %s275, %s279
          %s281 = smul.addr %s280, 64
          %s282 = scalar_lea.hbm %s3, %s281
          %s284 = sshll.u32 %s271, 4
          %s285 = int_to_ptr.vmem [resolvable:$true] %s284
          %287 = dma.vmem_to_hbm [thread:$0]  %s285, 128, %s282, %s268
        $region44: #{tpu_custom_call.1} parent=31 // pred_fallthru
          _
      $region32: #{tpu_custom_call.1} parent=5 // pred_fallthru
        _
      %p288 = scmp.le.s32.totalorder 2, %s17
      // Predicated region
      $region45: #{tpu_custom_call.1} parent=5 // pred_check
        %p289 = pneg %p288
      $region46: #{tpu_custom_call.1} parent=5 // pred_check_branch
        %291 = sbr.rel (%p289) target = $region48
      $region47: #{tpu_custom_call.1} parent=5 // pred_region
        %s292 = ssub.s32 %s17, 2
        // Predicated region
        $region49: #{tpu_custom_call.1} parent=47 // pred_check
          %p293 = pneg %p130
        $region50: #{tpu_custom_call.1} parent=47 // pred_check_branch
          %295 = sbr.rel (%p293) target = $region52
        $region51: #{tpu_custom_call.1} parent=47 // pred_region
          %s296 = sand.u32 %s115, 1
          %s297 = scalar_lea.sflag [#allocation5], %s296
          %s298 = sand.u32 %s115, 1
          %s299 = smul.addr %s298, 8
          %s300 = scalar_lea.vmem [#allocation8], %s299
          %301 = dma.done %s297, 128
        $region52: #{tpu_custom_call.1} parent=47 // pred_fallthru
          _
      $region48: #{tpu_custom_call.1} parent=5 // pred_fallthru
        _
    $region6: #{tpu_custom_call.1} parent=1 // loop_footer
      %s21 = sadd.s32 1, %s17
    $region7: #{tpu_custom_call.1} parent=1 // loop_footer_branch
      %16 = sbr.rel target = $region3
    $region8: #{tpu_custom_call.1} parent=1 // loop_exit
      _
    %302 = vsyncpa [#allocation4], 1
    %s303 = scalar_lea.sflag [#allocation4], 1
    %304 = vsyncpa %s303, 1
    %305 = vsyncpa [#allocation5], 1
    %s306 = scalar_lea.sflag [#allocation5], 1
    %307 = vsyncpa %s306, 1
    %308 = vsyncpa [#allocation6], 1
    %s309 = scalar_lea.sflag [#allocation6], 1
    %310 = vsyncpa %s309, 1

</llo_original>
